<compile_context>
chip_gen: v5e
topology: v5e:2x2
jax: 0.10.0
libtpu: 0.0.40
codegen_flags: <defaults>
</compile_context>

<pallas_src>
import jax
import jax.numpy as jnp
from jax.experimental import pallas as pl
from jax.experimental.pallas import tpu as pltpu


def _round_up(x, m):
    return ((x + m - 1) // m) * m


_VMEM_LIMIT = 32 * 1024 * 1024    # explicit scoped limit; safe on v5e/v6e/v7x
_VMEM_BUDGET = 24 * 1024 * 1024   # working-set target, headroom under the limit


def _maybe_pad(x, rows, cols, pad_dtype):
    """Zero-pad to (rows, cols).  Skips the wrapper pass entirely when already
    aligned (kernels cast on the fly); when padding is needed the bf16 cast is
    fused into the single pad pass so adj/inp are never touched twice."""
    r, c = x.shape
    if r == rows and c == cols:
        return x
    return jnp.pad(x.astype(pad_dtype), ((0, rows - r), (0, cols - c)))


# ---------------- feature transform: out = x @ W (+ bias) ----------------

def _transform(x, w, bias, *, out_dtype, compute_dtype, vmem_limit):
    n_pad, d_in_pad = x.shape
    d_out_pad = w.shape[1]
    x_item = x.dtype.itemsize
    out_item = jnp.dtype(out_dtype).itemsize

    # Row tile: as large as comfortably fits (the weight stays resident anyway).
    cands = ([n_pad] if n_pad <= 2048 else []) + [
        c for c in (2048, 1024, 512, 256, 128) if n_pad % c == 0]
    tm = cands[-1]
    for c in cands:
        ws = (2 * c * d_in_pad * x_item            # x blocks (double-buffered)
              + 2 * c * d_out_pad * out_item       # out blocks
              + 2 * d_in_pad * d_out_pad * 2)      # resident bf16 weight
        if ws <= _VMEM_BUDGET:
            tm = c
            break
    # TODO(synk): tile d_in / d_out for very wide layers where even tm=128
    # overflows the VMEM budget (the full weight block is double-buffered).

    if bias is not None:
        def kernel(x_ref, w_ref, b_ref, o_ref):
            acc = jnp.dot(x_ref[...].astype(compute_dtype), w_ref[...],
                          preferred_element_type=jnp.float32)
            o_ref[...] = (acc + b_ref[...]).astype(o_ref.dtype)

        in_specs = [
            pl.BlockSpec((tm, d_in_pad), lambda i: (i, 0)),
            pl.BlockSpec((d_in_pad, d_out_pad), lambda i: (0, 0)),
            pl.BlockSpec((1, d_out_pad), lambda i: (0, 0)),
        ]
        args = (x, w, bias)
    else:
        def kernel(x_ref, w_ref, o_ref):
            acc = jnp.dot(x_ref[...].astype(compute_dtype), w_ref[...],
                          preferred_element_type=jnp.float32)
            o_ref[...] = acc.astype(o_ref.dtype)

        in_specs = [
            pl.BlockSpec((tm, d_in_pad), lambda i: (i, 0)),
            pl.BlockSpec((d_in_pad, d_out_pad), lambda i: (0, 0)),
        ]
        args = (x, w)

    return pl.pallas_call(
        kernel,
        out_shape=jax.ShapeDtypeStruct((n_pad, d_out_pad), out_dtype),
        grid=(n_pad // tm,),
        in_specs=in_specs,
        out_specs=pl.BlockSpec((tm, d_out_pad), lambda i: (i, 0)),
        compiler_params=pltpu.CompilerParams(
            dimension_semantics=("parallel",),
            vmem_limit_bytes=vmem_limit,
        ),
    )(*args)


# ---------------- aggregation: out = adj @ x (+ bias) ----------------

def _aggregate(adj, x, bias, *, out_dtype, compute_dtype, tm, tk, vmem_limit):
    n_pad = adj.shape[0]
    dx = x.shape[1]
    adj_item = adj.dtype.itemsize
    x_item = x.dtype.itemsize
    out_item = jnp.dtype(out_dtype).itemsize

    if bias is None:
        bias = jnp.zeros((1, dx), jnp.float32)

    # Keep the aggregated operand VMEM-resident (grid-invariant block, DMA'd
    # once for the whole grid) whenever it fits; otherwise stream (tk, dx)
    # blocks per k step.  Budgeted conservatively (double buffers) so it stays
    # within v7x's 64 MiB VMEM as well as v5e/v6e's 128 MiB.
    resident_ws = (2 * n_pad * dx * x_item
                   + 2 * tm * tk * adj_item
                   + 2 * tm * dx * out_item
                   + tm * dx * 4)
    x_resident = resident_ws <= _VMEM_BUDGET

    def kernel(adj_ref, x_ref, b_ref, out_ref, acc_ref):
        k = pl.program_id(1)

        @pl.when(k == 0)
        def _():
            # Fold the bias into the accumulator init -> finalize is just a
            # cast + store (no extra full-tile VPU add in the epilogue).
            acc_ref[...] = pl.broadcast_to(b_ref[...], acc_ref.shape)

        if x_resident:
            start = pl.multiple_of(k * tk, 128)
            x_blk = x_ref[pl.ds(start, tk), :]
        else:
            x_blk = x_ref[...]

        acc_ref[...] += jnp.dot(
            adj_ref[...].astype(compute_dtype),
            x_blk.astype(compute_dtype),
            preferred_element_type=jnp.float32,
        )

        @pl.when(k == pl.num_programs(1) - 1)
        def _():
            out_ref[...] = acc_ref[...].astype(out_ref.dtype)

    x_spec = (pl.BlockSpec((n_pad, dx), lambda i, k: (0, 0)) if x_resident
              else pl.BlockSpec((tk, dx), lambda i, k: (k, 0)))

    return pl.pallas_call(
        kernel,
        out_shape=jax.ShapeDtypeStruct((n_pad, dx), out_dtype),
        grid=(n_pad // tm, n_pad // tk),
        in_specs=[
            pl.BlockSpec((tm, tk), lambda i, k: (i, k)),   # adj row / k block
            x_spec,                                        # aggregated operand
            pl.BlockSpec((1, dx), lambda i, k: (0, 0)),    # bias (grid-invariant)
        ],
        out_specs=pl.BlockSpec((tm, dx), lambda i, k: (i, 0)),
        scratch_shapes=[pltpu.VMEM((tm, dx), jnp.float32)],
        compiler_params=pltpu.CompilerParams(
            dimension_semantics=("parallel", "arbitrary"),
            vmem_limit_bytes=vmem_limit,
        ),
    )(adj, x, bias)


def graph_conv(inp, adj, kernel, bias, *, compute_dtype=jnp.bfloat16):
    """GCN layer: adj @ (inp @ kernel) + bias.

    inp: (N, D_in), adj: (N, N) dense, kernel: (D_in, D_out), bias: (D_out,).
    """
    n, d_in = inp.shape
    d_out = kernel.shape[1]
    out_dtype = inp.dtype

    d_in_pad = _round_up(d_in, 128)
    d_out_pad = _round_up(d_out, 128)

    # N-axis geometry: pad to the 128-lane granule first and pick tiles that
    # divide n_pad exactly (no lcm blow-up for awkward N); tiny graphs collapse
    # to one block instead of many near-empty tiles.
    n_pad = _round_up(n, 128)
    if n_pad <= 1024:
        tk = n_pad
        half = n_pad // 2
        tm = half if half % 128 == 0 else n_pad   # >=2 row blocks when possible (v7x cores)
    else:
        n_pad = _round_up(n, 512)
        tm = 512
        tk = 1024 if n_pad % 1024 == 0 else 512   # bigger k tile -> fewer grid steps

    # Parameters are tiny: always pad/cast them.  adj / inp only pay a wrapper
    # pass when a ragged edge actually exists.
    w_p = jnp.pad(kernel.astype(compute_dtype),
                  ((0, d_in_pad - d_in), (0, d_out_pad - d_out)))
    bias_p = jnp.pad(bias.astype(jnp.float32).reshape(1, d_out),
                     ((0, 0), (0, d_out_pad - d_out)))
    inp_p = _maybe_pad(inp, n_pad, d_in_pad, compute_dtype)
    adj_p = _maybe_pad(adj, n_pad, n_pad, compute_dtype)

    if d_in_pad < d_out_pad:
        # Aggregate first so the N^2 GEMM runs at the narrower feature width.
        h = _aggregate(adj_p, inp_p, None, out_dtype=compute_dtype,
                       compute_dtype=compute_dtype, tm=tm, tk=tk,
                       vmem_limit=_VMEM_LIMIT)
        out_p = _transform(h, w_p, bias_p, out_dtype=out_dtype,
                           compute_dtype=compute_dtype, vmem_limit=_VMEM_LIMIT)
    else:
        support = _transform(inp_p, w_p, None, out_dtype=compute_dtype,
                             compute_dtype=compute_dtype, vmem_limit=_VMEM_LIMIT)
        out_p = _aggregate(adj_p, support, bias_p, out_dtype=out_dtype,
                           compute_dtype=compute_dtype, tm=tm, tk=tk,
                           vmem_limit=_VMEM_LIMIT)

    return out_p[:n, :d_out]


if __name__ == "__main__":
    # Mirrors the torch spec: adj_mat = torch.rand(4, 4).to_sparse(),
    # inp = torch.rand(4, 4), GraphConv(input_dim=4, output_dim=8),
    # kernel/bias initialized with torch.nn.init.ones_.
    N, INPUT_DIM, OUTPUT_DIM = 4, 4, 8
    kernel = jnp.ones((INPUT_DIM, OUTPUT_DIM), dtype=jnp.float32)
    bias = jnp.ones((OUTPUT_DIM,), dtype=jnp.float32)

    key = jax.random.PRNGKey(0)
    k_inp, k_adj = jax.random.split(key)
    inp = jax.random.uniform(k_inp, (N, INPUT_DIM), dtype=jnp.float32)
    adj = jax.random.uniform(k_adj, (N, N), dtype=jnp.float32)

    out = graph_conv(inp, adj, kernel, bias)
    jax.block_until_ready(out)

    # Plain-JAX f32 reference; kernel uses bf16 MXU operands with f32
    # accumulation, so compare with a bf16-appropriate tolerance.
    ref = adj @ (inp @ kernel) + bias
    assert out.shape == (N, OUTPUT_DIM), out.shape
    assert out.dtype == inp.dtype, out.dtype
    assert jnp.allclose(out, ref, atol=5e-2, rtol=2e-2), (out, ref)

    print("KERNEL_OK")
</pallas_src>

<mosaic_0001>
module attributes {stable_mosaic.version = 11 : i64} {
  func.func @kernel(%arg0: i32, %arg1: memref<128x128xbf16, #tpu.memory_space<vmem>>, %arg2: memref<128x128xbf16, #tpu.memory_space<vmem>>, %arg3: memref<128x128xbf16, #tpu.memory_space<vmem>>) attributes {dimension_semantics = [#tpu.dimension_semantics<parallel>], iteration_bounds = array<i64: 1>, scalar_prefetch = 0 : i64, scratch_operands = 0 : i64, tpu.core_type = #tpu.core_type<tc>, window_params = [{transform_indices = @transform_0, window_bounds = array<i64: 128, 128>}, {pipeline_mode = #tpu.pipeline_mode<synchronous>, transform_indices = @transform_1, window_bounds = array<i64: 128, 128>}, {transform_indices = @transform_2, window_bounds = array<i64: 128, 128>}]} {
    %c0 = arith.constant 0 : index
    %c0_0 = arith.constant 0 : index
    %0 = vector.load %arg1[%c0, %c0_0] : memref<128x128xbf16, #tpu.memory_space<vmem>>, vector<128x128xbf16>
    %c0_1 = arith.constant 0 : index
    %c0_2 = arith.constant 0 : index
    %1 = vector.load %arg2[%c0_1, %c0_2] : memref<128x128xbf16, #tpu.memory_space<vmem>>, vector<128x128xbf16>
    %cst = arith.constant dense<0.000000e+00> : vector<128x128xf32>
    %2 = tpu.matmul %0, %1, %cst {dimension_numbers = #tpu.dot_dimension_numbers<[1], [0], [0], [1], [0, 0, 1, 1], [], []>} : vector<128x128xbf16>, vector<128x128xbf16>, vector<128x128xf32> -> vector<128x128xf32>
    %3 = arith.truncf %2 : vector<128x128xf32> to vector<128x128xbf16>
    %c0_3 = arith.constant 0 : index
    %c0_4 = arith.constant 0 : index
    %4 = vector.load %arg3[%c0_3, %c0_4] : memref<128x128xbf16, #tpu.memory_space<vmem>>, vector<128x128xbf16>
    tpu.vector_store %arg3[%c0_3, %c0_4], %3 {strides = array<i32>} : memref<128x128xbf16, #tpu.memory_space<vmem>>, vector<128x128xbf16>,
    return
  }
  func.func @transform_0(%arg0: i32) -> (i32, i32) {
    %c0_i32 = arith.constant 0 : i32
    %c0_i32_0 = arith.constant 0 : i32
    return %arg0, %c0_i32 : i32, i32
  }
  func.func @transform_1(%arg0: i32) -> (i32, i32) {
    %c0_i32 = arith.constant 0 : i32
    %c0_i32_0 = arith.constant 0 : i32
    %c0_i32_1 = arith.constant 0 : i32
    return %c0_i32, %c0_i32_0 : i32, i32
  }
  func.func @transform_2(%arg0: i32) -> (i32, i32) {
    %c0_i32 = arith.constant 0 : i32
    %c0_i32_0 = arith.constant 0 : i32
    return %arg0, %c0_i32 : i32, i32
  }
}

</mosaic_0001>

<llo_original>
// kernel: tpu_custom_call.1
$region0: #{tpu_custom_call.1}
  #allocation0 [shape = 'u32[]', space=smem, size = 0x4, offset = 0x4, fixed_abs, tag = 'smem constant byte address 0x4 - core index']
  #allocation1 [shape = 'u32[72,128]{1,0:T(1,128)}', space=vmem, size = 0x9000, scoped, tag = 'internal scratch']
  %s0 = inlined_call_operand.hbm [shape: bf16[128,128], index: 0, kind: input, shape index: {}]
  %s1 = inlined_call_operand.hbm [shape: bf16[128,128], index: 1, kind: input, shape index: {}]
  %s2 = inlined_call_operand.hbm [shape: bf16[128,128], index: 2, kind: output, shape index: {}]
  %s3 = sld [smem:[#allocation0]]
  $region26: #{tpu_custom_call.1} parent=0
    _
  %s5 = ssub.s32 1, %s3
  %s6 = scalar_select 0, %s5, %s3
  $region1: #{tpu_custom_call.1} parent=0
    #allocation2 [shape = 'u8[32768]{0}', space=vmem, size = 0x8000, scoped, tag = 'input window, operand 0, single buffered']
    #allocation3 [shape = 's32[1]{0}', space=sflag, size = 0x4, scoped, tag = 'scoped memory for tpu_custom_call.1']
    #allocation4 [shape = 's32[1]{0}', space=sflag, size = 0x4, scoped, tag = 'scoped memory for tpu_custom_call.1']
    #allocation5 [shape = 'u8[32768]{0}', space=vmem, size = 0x8000, scoped, tag = 'input window, operand 1, single buffered']
    #allocation6 [shape = 's32[1]{0}', space=sflag, size = 0x4, scoped, tag = 'scoped memory for tpu_custom_call.1']
    #allocation7 [shape = 'u8[32768]{0}', space=vmem, size = 0x8000, scoped, tag = 'output window, operand 0, single buffered']
    %7 = vsyncpa [#allocation3], 0
    %8 = vsyncpa [#allocation6], 0
    %9 = vsyncpa [#allocation4], 0
    // Predicated region
    $region2: #{tpu_custom_call.1} parent=1 // pred_check
      _
    $region3: #{tpu_custom_call.1} parent=1 // pred_check_branch
      %11 = sbr.rel (0) target = $region5
    $region4: #{tpu_custom_call.1} parent=1 // pred_region
      %13 = vsyncadd [#allocation3], 0
      %s14 = sshll.u32 %s0, 4
      %s15 = int_to_ptr.hbm [resolvable:$true] %s14
      %s16 = sshll.u32 [#allocation2], 4
      %s17 = int_to_ptr.vmem [resolvable:$true] %s16
      %22 = dma.hbm_to_vmem [thread:$0]  %s15, 1024, %s17, [#allocation3], 64, 64, 4
    $region5: #{tpu_custom_call.1} parent=1 // pred_fallthru
      _
    // Predicated region
    $region6: #{tpu_custom_call.1} parent=1 // pred_check
      _
    $region7: #{tpu_custom_call.1} parent=1 // pred_check_branch
      %24 = sbr.rel (0) target = $region9
    $region8: #{tpu_custom_call.1} parent=1 // pred_region
      %26 = vsyncadd [#allocation6], 0
      %s27 = sshll.u32 %s1, 4
      %s28 = int_to_ptr.hbm [resolvable:$true] %s27
      %s29 = sshll.u32 [#allocation5], 4
      %s30 = int_to_ptr.vmem [resolvable:$true] %s29
      %35 = dma.hbm_to_vmem [thread:$0]  %s28, 1024, %s30, [#allocation6], 64, 64, 4
    $region9: #{tpu_custom_call.1} parent=1 // pred_fallthru
      _
    // Predicated region
    $region10: #{tpu_custom_call.1} parent=1 // pred_check
      _
    $region11: #{tpu_custom_call.1} parent=1 // pred_check_branch
      %37 = sbr.rel (0) target = $region13
    $region12: #{tpu_custom_call.1} parent=1 // pred_region
      %39 = dma.done [#allocation3], 1024
    $region13: #{tpu_custom_call.1} parent=1 // pred_fallthru
      _
    // Predicated region
    $region14: #{tpu_custom_call.1} parent=1 // pred_check
      _
    $region15: #{tpu_custom_call.1} parent=1 // pred_check_branch
      %41 = sbr.rel (0) target = $region17
    $region16: #{tpu_custom_call.1} parent=1 // pred_region
      %43 = dma.done [#allocation6], 1024
    $region17: #{tpu_custom_call.1} parent=1 // pred_fallthru
      _
    %v44 = vld [vmem:[#allocation2] sm:$0xf]
    %v45 = vld [vmem:[#allocation2 + $0x4] sm:$0xf]
    %v46 = vld [vmem:[#allocation2 + $0x8] sm:$0xf]
    %v47 = vld [vmem:[#allocation2 + $0xc] sm:$0xf]
    %v48 = vld [vmem:[#allocation2 + $0x10] sm:$0xf]
    %v49 = vld [vmem:[#allocation2 + $0x14] sm:$0xf]
    %v50 = vld [vmem:[#allocation2 + $0x18] sm:$0xf]
    %v51 = vld [vmem:[#allocation2 + $0x1c] sm:$0xf]
    %v52 = vld [vmem:[#allocation2 + $0x20] sm:$0xf]
    %v53 = vld [vmem:[#allocation2 + $0x24] sm:$0xf]
    %v54 = vld [vmem:[#allocation2 + $0x28] sm:$0xf]
    %v55 = vld [vmem:[#allocation2 + $0x2c] sm:$0xf]
    %v56 = vld [vmem:[#allocation2 + $0x30] sm:$0xf]
    %v57 = vld [vmem:[#allocation2 + $0x34] sm:$0xf]
    %v58 = vld [vmem:[#allocation2 + $0x38] sm:$0xf]
    %v59 = vld [vmem:[#allocation2 + $0x3c] sm:$0xf]
    %v60 = vld [vmem:[#allocation5] sm:$0xf]
    %v61 = vld [vmem:[#allocation5 + $0x4] sm:$0xf]
    %v62 = vld [vmem:[#allocation5 + $0x8] sm:$0xf]
    %v63 = vld [vmem:[#allocation5 + $0xc] sm:$0xf]
    %v64 = vld [vmem:[#allocation5 + $0x10] sm:$0xf]
    %v65 = vld [vmem:[#allocation5 + $0x14] sm:$0xf]
    %v66 = vld [vmem:[#allocation5 + $0x18] sm:$0xf]
    %v67 = vld [vmem:[#allocation5 + $0x1c] sm:$0xf]
    %v68 = vld [vmem:[#allocation5 + $0x20] sm:$0xf]
    %v69 = vld [vmem:[#allocation5 + $0x24] sm:$0xf]
    %v70 = vld [vmem:[#allocation5 + $0x28] sm:$0xf]
    %v71 = vld [vmem:[#allocation5 + $0x2c] sm:$0xf]
    %v72 = vld [vmem:[#allocation5 + $0x30] sm:$0xf]
    %v73 = vld [vmem:[#allocation5 + $0x34] sm:$0xf]
    %v74 = vld [vmem:[#allocation5 + $0x38] sm:$0xf]
    %v75 = vld [vmem:[#allocation5 + $0x3c] sm:$0xf]
    %v92 = vunpack.c.l.b16 %v44
    %v93 = vunpack.c.l.b16 %v45
    %v94 = vunpack.c.l.b16 %v46
    %v95 = vunpack.c.l.b16 %v47
    %v96 = vunpack.c.l.b16 %v48
    %v97 = vunpack.c.l.b16 %v49
    %v98 = vunpack.c.l.b16 %v50
    %v99 = vunpack.c.l.b16 %v51
    %v100 = vunpack.c.l.b16 %v52
    %v101 = vunpack.c.l.b16 %v53
    %v102 = vunpack.c.l.b16 %v54
    %v103 = vunpack.c.l.b16 %v55
    %v104 = vunpack.c.l.b16 %v56
    %v105 = vunpack.c.l.b16 %v57
    %v106 = vunpack.c.l.b16 %v58
    %v107 = vunpack.c.l.b16 %v59
    %v108 = vpack.c.b16 %v93, %v92
    %v109 = vpack.c.b16 %v95, %v94
    %v110 = vpack.c.b16 %v97, %v96
    %v111 = vpack.c.b16 %v99, %v98
    %v112 = vpack.c.b16 %v101, %v100
    %v113 = vpack.c.b16 %v103, %v102
    %v114 = vpack.c.b16 %v105, %v104
    %v115 = vpack.c.b16 %v107, %v106
    %v140 = vunpack.c.l.b16 %v60
    %v141 = vunpack.c.l.b16 %v61
    %v142 = vunpack.c.l.b16 %v62
    %v143 = vunpack.c.l.b16 %v63
    %v144 = vunpack.c.l.b16 %v64
    %v145 = vunpack.c.l.b16 %v65
    %v146 = vunpack.c.l.b16 %v66
    %v147 = vunpack.c.l.b16 %v67
    %v148 = vunpack.c.l.b16 %v68
    %v149 = vunpack.c.l.b16 %v69
    %v150 = vunpack.c.l.b16 %v70
    %v151 = vunpack.c.l.b16 %v71
    %v152 = vunpack.c.l.b16 %v72
    %v153 = vunpack.c.l.b16 %v73
    %v154 = vunpack.c.l.b16 %v74
    %v155 = vunpack.c.l.b16 %v75
    %v156 = vpack.c.b16 %v141, %v140
    %v157 = vpack.c.b16 %v143, %v142
    %v158 = vpack.c.b16 %v145, %v144
    %v159 = vpack.c.b16 %v147, %v146
    %v160 = vpack.c.b16 %v149, %v148
    %v161 = vpack.c.b16 %v151, %v150
    %v162 = vpack.c.b16 %v153, %v152
    %v163 = vpack.c.b16 %v155, %v154
    %172 = vmatpush.bf16.msra.mxu0 %v163
    %173 = vmatpush.bf16.msra.mxu0 %v162
    %174 = vmatpush.bf16.msra.mxu0 %v161
    %175 = vmatpush.bf16.msra.mxu0 %v160
    %176 = vmatpush.bf16.msra.mxu0 %v159
    %177 = vmatpush.bf16.msra.mxu0 %v158
    %178 = vmatpush.bf16.msra.mxu0 %v157
    %179 = vmatpush.bf16.msra.mxu0 %v156
    %180 = vmatmul.bf16.gmra.mxu0 %v108
    %v181 = vpop.f32.mrf.mxu0
    %v182 = vadd.f32 0.0, %v181
    %v183 = vpop.f32.mrf.mxu0
    %v184 = vadd.f32 0.0, %v183
    %185 = vmatmul.bf16.gmra.mxu0 %v109
    %v186 = vpop.f32.mrf.mxu0
    %v187 = vadd.f32 0.0, %v186
    %v188 = vpop.f32.mrf.mxu0
    %v189 = vadd.f32 0.0, %v188
    %190 = vmatmul.bf16.gmra.mxu0 %v110
    %v191 = vpop.f32.mrf.mxu0
    %v192 = vadd.f32 0.0, %v191
    %v193 = vpop.f32.mrf.mxu0
    %v194 = vadd.f32 0.0, %v193
    %195 = vmatmul.bf16.gmra.mxu0 %v111
    %v196 = vpop.f32.mrf.mxu0
    %v197 = vadd.f32 0.0, %v196
    %v198 = vpop.f32.mrf.mxu0
    %v199 = vadd.f32 0.0, %v198
    %200 = vmatmul.bf16.gmra.mxu0 %v112
    %v201 = vpop.f32.mrf.mxu0
    %v202 = vadd.f32 0.0, %v201
    %v203 = vpop.f32.mrf.mxu0
    %v204 = vadd.f32 0.0, %v203
    %205 = vmatmul.bf16.gmra.mxu0 %v113
    %v206 = vpop.f32.mrf.mxu0
    %v207 = vadd.f32 0.0, %v206
    %v208 = vpop.f32.mrf.mxu0
    %v209 = vadd.f32 0.0, %v208
    %210 = vmatmul.bf16.gmra.mxu0 %v114
    %v211 = vpop.f32.mrf.mxu0
    %v212 = vadd.f32 0.0, %v211
    %v213 = vpop.f32.mrf.mxu0
    %v214 = vadd.f32 0.0, %v213
    %215 = vmatmul.bf16.gmra.mxu0 %v115
    %v216 = vpop.f32.mrf.mxu0
    %v217 = vadd.f32 0.0, %v216
    %v218 = vpop.f32.mrf.mxu0
    %v219 = vadd.f32 0.0, %v218
    %220 = vdwg.mxu0
    %v221 = vpack.c.bf16 %v182, %v182
    %v222 = vpack.c.bf16 %v184, %v184
    %v223 = vpack.c.bf16 %v187, %v187
    %v224 = vpack.c.bf16 %v189, %v189
    %v225 = vpack.c.bf16 %v192, %v192
    %v226 = vpack.c.bf16 %v194, %v194
    %v227 = vpack.c.bf16 %v197, %v197
    %v228 = vpack.c.bf16 %v199, %v199
    %v229 = vpack.c.bf16 %v202, %v202
    %v230 = vpack.c.bf16 %v204, %v204
    %v231 = vpack.c.bf16 %v207, %v207
    %v232 = vpack.c.bf16 %v209, %v209
    %v233 = vpack.c.bf16 %v212, %v212
    %v234 = vpack.c.bf16 %v214, %v214
    %v235 = vpack.c.bf16 %v217, %v217
    %v236 = vpack.c.bf16 %v219, %v219
    %237 = vst [vmem:[#allocation7] sm:$0xf] %v221
    %238 = vst [vmem:[#allocation7 + $0x4] sm:$0xf] %v222
    %239 = vst [vmem:[#allocation7 + $0x8] sm:$0xf] %v223
    %240 = vst [vmem:[#allocation7 + $0xc] sm:$0xf] %v224
    %241 = vst [vmem:[#allocation7 + $0x10] sm:$0xf] %v225
    %242 = vst [vmem:[#allocation7 + $0x14] sm:$0xf] %v226
    %243 = vst [vmem:[#allocation7 + $0x18] sm:$0xf] %v227
    %244 = vst [vmem:[#allocation7 + $0x1c] sm:$0xf] %v228
    %245 = vst [vmem:[#allocation7 + $0x20] sm:$0xf] %v229
    %246 = vst [vmem:[#allocation7 + $0x24] sm:$0xf] %v230
    %247 = vst [vmem:[#allocation7 + $0x28] sm:$0xf] %v231
    %248 = vst [vmem:[#allocation7 + $0x2c] sm:$0xf] %v232
    %249 = vst [vmem:[#allocation7 + $0x30] sm:$0xf] %v233
    %250 = vst [vmem:[#allocation7 + $0x34] sm:$0xf] %v234
    %251 = vst [vmem:[#allocation7 + $0x38] sm:$0xf] %v235
    %252 = vst [vmem:[#allocation7 + $0x3c] sm:$0xf] %v236
    // Predicated region
    $region18: #{tpu_custom_call.1} parent=1 // pred_check
      _
    $region19: #{tpu_custom_call.1} parent=1 // pred_check_branch
      %254 = sbr.rel (0) target = $region21
    $region20: #{tpu_custom_call.1} parent=1 // pred_region
      %256 = vsyncadd [#allocation4], 0
      %s257 = sshll.u32 [#allocation7], 4
      %s258 = int_to_ptr.vmem [resolvable:$true] %s257
      %s259 = sshll.u32 %s2, 4
      %s260 = int_to_ptr.hbm [resolvable:$true] %s259
      %265 = dma.vmem_to_hbm [thread:$0]  %s258, 1024, %s260, [#allocation4], 64, 64, 4
    $region21: #{tpu_custom_call.1} parent=1 // pred_fallthru
      _
    // Predicated region
    $region22: #{tpu_custom_call.1} parent=1 // pred_check
      _
    $region23: #{tpu_custom_call.1} parent=1 // pred_check_branch
      %267 = sbr.rel (0) target = $region25
    $region24: #{tpu_custom_call.1} parent=1 // pred_region
      %269 = dma.done [#allocation4], 1024
    $region25: #{tpu_custom_call.1} parent=1 // pred_fallthru
      _
    %270 = vsyncpa [#allocation3], 1
    %271 = vsyncpa [#allocation6], 1
    %272 = vsyncpa [#allocation4], 1

</llo_original>
